<compile_context>
chip_gen: v6e
topology: v6e:2x2x1
jax: 0.10.0
libtpu: 0.0.40
codegen_flags: <defaults>
</compile_context>

<pallas_src>
import functools

import jax
import jax.numpy as jnp
from jax.experimental import pallas as pl
from jax.experimental.pallas import tpu as pltpu

KH = KW = 3   # kernel_size=3
PAD = 1       # padding=1
# stride=1 (module default)


def _dwsep_kernel(x_ref, wdw_ref, mask_ref, wpw_ref, bias_ref, o_ref, *, W):
    # x_ref   : (1, C, HW)  VMEM   one image, spatial flattened onto lanes
    # wdw_ref : (C, 9)      VMEM   depthwise 3x3 weights (tap-major columns)
    # mask_ref: (9, HW)     VMEM   per-tap 0/1 validity masks (zero padding)
    # wpw_ref : (C*C,)      SMEM   pointwise weights, flat row-major (co*C + ci)
    # bias_ref: (C,)        SMEM   effective pointwise bias (b_pw + W_pw @ b_dw)
    # o_ref   : (1, C, HW)  VMEM
    C = o_ref.shape[1]
    HW = o_ref.shape[2]

    x_all = x_ref[0].astype(jnp.float32)          # (C, HW)
    wdw_all = wdw_ref[...].astype(jnp.float32)    # (C, 9)
    m_all = mask_ref[...]                         # (9, HW) f32 0/1

    # ---- depthwise 3x3: 9 lane-rolled taps, masked at image borders ----
    dw_acc = None
    for kh in range(KH):
        for kw in range(KW):
            k = kh * KW + kw
            off = (kh - PAD) * W + (kw - PAD)     # flattened tap offset
            if off == 0:
                shifted = x_all
            else:
                # shifted[p] = x_all[(p + off) mod HW]  (wrap killed by mask)
                shifted = pltpu.roll(x_all, shift=(-off) % HW, axis=1)
            if off != 0:
                shifted = shifted * m_all[k:k + 1, :]        # (1,HW) bcast
            contrib = shifted * wdw_all[:, k:k + 1]          # (C,1) bcast
            dw_acc = contrib if dw_acc is None else dw_acc + contrib
    # dw_acc: (C, HW) depthwise conv output (bias folded into pointwise bias)

    # ---- pointwise 1x1: register-accumulated scalar-broadcast MACs ----
    # (VPU path for tiny C; route through jnp.dot/MXU for C >= ~64.)
    rows = []
    for co in range(C):
        acc = None
        for ci in range(C):
            term = dw_acc[ci:ci + 1, :] * wpw_ref[co * C + ci]
            acc = term if acc is None else acc + term
        rows.append(acc + bias_ref[co])
    out = jnp.concatenate(rows, axis=0)            # (C, HW), single store below
    o_ref[0] = out.astype(o_ref.dtype)


def depthwise_separable_conv(x_nchw, w_dw, b_dw, w_pw, b_pw):
    """x_nchw: (B, C, H, W)
    w_dw: (C, 1, 3, 3)   depthwise weight (PyTorch layout)
    b_dw: (C,)           depthwise bias
    w_pw: (C, C, 1, 1)   pointwise weight (PyTorch layout)
    b_pw: (C,)           pointwise bias
    returns: (B, C, H, W)
    """
    B, C, H, W = x_nchw.shape
    HW = H * W

    # Lane-dense flattened-spatial view (contiguous reshape, no HBM shuffle).
    x_flat = x_nchw.reshape(B, C, HW)

    # Tiny parameter massaging (all O(C^2) work, done once in the wrapper).
    wdw = w_dw.reshape(C, KH * KW).astype(jnp.float32)            # (C, 9)
    wpw_mat = w_pw.reshape(C, C).astype(jnp.float32)              # (Cout, Cin)
    b_eff = b_pw.astype(jnp.float32) + wpw_mat @ b_dw.astype(jnp.float32)
    wpw_1d = wpw_mat.reshape(C * C)                               # flat SMEM

    # Per-tap 0/1 validity masks over flattened positions (= zero padding).
    pos = jnp.arange(HW)
    h_idx = pos // W
    w_idx = pos % W
    masks = []
    for kh in range(KH):
        for kw in range(KW):
            dh, dw = kh - PAD, kw - PAD
            ok = ((h_idx + dh >= 0) & (h_idx + dh <= H - 1)
                  & (w_idx + dw >= 0) & (w_idx + dw <= W - 1))
            masks.append(ok)
    mask_tbl = jnp.stack(masks, axis=0).astype(jnp.float32)        # (9, HW)

    kernel = functools.partial(_dwsep_kernel, W=W)

    out_flat = pl.pallas_call(
        kernel,
        out_shape=jax.ShapeDtypeStruct((B, C, HW), x_nchw.dtype),
        grid_spec=pltpu.PrefetchScalarGridSpec(
            num_scalar_prefetch=0,
            grid=(B,),
            in_specs=[
                pl.BlockSpec((1, C, HW), lambda b: (b, 0, 0)),          # x
                pl.BlockSpec((C, KH * KW), lambda b: (0, 0)),           # wdw
                pl.BlockSpec((KH * KW, HW), lambda b: (0, 0)),          # masks
                pl.BlockSpec(memory_space=pltpu.MemorySpace.SMEM),      # wpw
                pl.BlockSpec(memory_space=pltpu.MemorySpace.SMEM),      # b_eff
            ],
            out_specs=pl.BlockSpec((1, C, HW), lambda b: (b, 0, 0)),
        ),
        compiler_params=pltpu.CompilerParams(
            dimension_semantics=("parallel",)),
    )(x_flat, wdw, mask_tbl, wpw_1d, b_eff)

    return out_flat.reshape(B, C, H, W)


def _reference(x_nchw, w_dw, b_dw, w_pw, b_pw):
    """Pure-JAX reference using lax convolutions (matches nn.Conv2d semantics)."""
    C = x_nchw.shape[1]
    dn = jax.lax.conv_dimension_numbers(x_nchw.shape, w_dw.shape,
                                        ("NCHW", "OIHW", "NCHW"))
    y = jax.lax.conv_general_dilated(
        x_nchw, w_dw, window_strides=(1, 1), padding=((PAD, PAD), (PAD, PAD)),
        dimension_numbers=dn, feature_group_count=C)
    y = y + b_dw.reshape(1, C, 1, 1)
    y = jax.lax.conv_general_dilated(
        y, w_pw, window_strides=(1, 1), padding="VALID",
        dimension_numbers=dn)
    y = y + b_pw.reshape(1, C, 1, 1)
    return y


if __name__ == "__main__":
    B, C, H, W = 2, 4, 16, 16

    key = jax.random.PRNGKey(0)
    kx, k1, k2, k3, k4 = jax.random.split(key, 5)

    x = jax.random.normal(kx, (B, C, H, W), dtype=jnp.float32)
    w_dw = jax.random.normal(k1, (C, 1, KH, KW), dtype=jnp.float32) * 0.1
    b_dw = jax.random.normal(k2, (C,), dtype=jnp.float32) * 0.1
    w_pw = jax.random.normal(k3, (C, C, 1, 1), dtype=jnp.float32) * 0.1
    b_pw = jax.random.normal(k4, (C,), dtype=jnp.float32) * 0.1

    out = depthwise_separable_conv(x, w_dw, b_dw, w_pw, b_pw)
    out = jax.block_until_ready(out)

    ref = _reference(x, w_dw, b_dw, w_pw, b_pw)
    assert out.shape == (B, C, H, W)
    assert jnp.allclose(out, ref, atol=1e-4, rtol=1e-4), "mismatch vs reference"

    print("KERNEL_OK")
</pallas_src>

<mosaic_0001>
module attributes {stable_mosaic.version = 11 : i64} {
  func.func @_dwsep_kernel(%arg0: i32, %arg1: memref<1x4x256xf32, #tpu.memory_space<vmem>>, %arg2: memref<4x9xf32, #tpu.memory_space<vmem>>, %arg3: memref<9x256xf32, #tpu.memory_space<vmem>>, %arg4: memref<16xf32, #tpu.memory_space<smem>>, %arg5: memref<4xf32, #tpu.memory_space<smem>>, %arg6: memref<1x4x256xf32, #tpu.memory_space<vmem>>) attributes {dimension_semantics = [#tpu.dimension_semantics<parallel>], iteration_bounds = array<i64: 2>, scalar_prefetch = 0 : i64, scratch_operands = 0 : i64, tpu.core_type = #tpu.core_type<tc>, window_params = [{transform_indices = @transform_0, window_bounds = array<i64: 1, 4, 256>}, {pipeline_mode = #tpu.pipeline_mode<synchronous>, transform_indices = @transform_1, window_bounds = array<i64: 4, 9>}, {pipeline_mode = #tpu.pipeline_mode<synchronous>, transform_indices = @transform_2, window_bounds = array<i64: 9, 256>}, {transform_indices = @transform_3, window_bounds = array<i64: 16>}, {transform_indices = @transform_4, window_bounds = array<i64: 4>}, {transform_indices = @transform_5, window_bounds = array<i64: 1, 4, 256>}]} {
    %c0 = arith.constant 0 : index
    %c0_0 = arith.constant 0 : index
    %c0_1 = arith.constant 0 : index
    %0 = vector.load %arg1[%c0, %c0_0, %c0_1] : memref<1x4x256xf32, #tpu.memory_space<vmem>>, vector<1x4x256xf32>
    %1 = vector.shape_cast %0 : vector<1x4x256xf32> to vector<4x256xf32>
    %c0_2 = arith.constant 0 : index
    %c0_3 = arith.constant 0 : index
    %2 = vector.load %arg2[%c0_2, %c0_3] : memref<4x9xf32, #tpu.memory_space<vmem>>, vector<4x9xf32>
    %c0_4 = arith.constant 0 : index
    %c0_5 = arith.constant 0 : index
    %3 = vector.load %arg3[%c0_4, %c0_5] : memref<9x256xf32, #tpu.memory_space<vmem>>, vector<9x256xf32>
    %c17_i32 = arith.constant 17 : i32
    %4 = tpu.dynamic_rotate %1 by %c17_i32 dim 1 : vector<4x256xf32>, i32 -> vector<4x256xf32>
    %5 = vector.extract_strided_slice %3 {offsets = [0, 0], sizes = [1, 256], strides = [1, 1]} : vector<9x256xf32> to vector<1x256xf32>
    %6 = vector.broadcast %5 : vector<1x256xf32> to vector<4x256xf32>
    %7 = arith.mulf %4, %6 : vector<4x256xf32>
    %8 = vector.extract_strided_slice %2 {offsets = [0, 0], sizes = [4, 1], strides = [1, 1]} : vector<4x9xf32> to vector<4x1xf32>
    %9 = vector.broadcast %8 : vector<4x1xf32> to vector<4x256xf32>
    %10 = arith.mulf %7, %9 : vector<4x256xf32>
    %c16_i32 = arith.constant 16 : i32
    %11 = tpu.dynamic_rotate %1 by %c16_i32 dim 1 : vector<4x256xf32>, i32 -> vector<4x256xf32>
    %12 = vector.extract_strided_slice %3 {offsets = [1, 0], sizes = [1, 256], strides = [1, 1]} : vector<9x256xf32> to vector<1x256xf32>
    %13 = vector.broadcast %12 : vector<1x256xf32> to vector<4x256xf32>
    %14 = arith.mulf %11, %13 : vector<4x256xf32>
    %15 = vector.extract_strided_slice %2 {offsets = [0, 1], sizes = [4, 1], strides = [1, 1]} : vector<4x9xf32> to vector<4x1xf32>
    %16 = vector.broadcast %15 : vector<4x1xf32> to vector<4x256xf32>
    %17 = arith.mulf %14, %16 : vector<4x256xf32>
    %18 = arith.addf %10, %17 : vector<4x256xf32>
    %c15_i32 = arith.constant 15 : i32
    %19 = tpu.dynamic_rotate %1 by %c15_i32 dim 1 : vector<4x256xf32>, i32 -> vector<4x256xf32>
    %20 = vector.extract_strided_slice %3 {offsets = [2, 0], sizes = [1, 256], strides = [1, 1]} : vector<9x256xf32> to vector<1x256xf32>
    %21 = vector.broadcast %20 : vector<1x256xf32> to vector<4x256xf32>
    %22 = arith.mulf %19, %21 : vector<4x256xf32>
    %23 = vector.extract_strided_slice %2 {offsets = [0, 2], sizes = [4, 1], strides = [1, 1]} : vector<4x9xf32> to vector<4x1xf32>
    %24 = vector.broadcast %23 : vector<4x1xf32> to vector<4x256xf32>
    %25 = arith.mulf %22, %24 : vector<4x256xf32>
    %26 = arith.addf %18, %25 : vector<4x256xf32>
    %c1_i32 = arith.constant 1 : i32
    %27 = tpu.dynamic_rotate %1 by %c1_i32 dim 1 : vector<4x256xf32>, i32 -> vector<4x256xf32>
    %28 = vector.extract_strided_slice %3 {offsets = [3, 0], sizes = [1, 256], strides = [1, 1]} : vector<9x256xf32> to vector<1x256xf32>
    %29 = vector.broadcast %28 : vector<1x256xf32> to vector<4x256xf32>
    %30 = arith.mulf %27, %29 : vector<4x256xf32>
    %31 = vector.extract_strided_slice %2 {offsets = [0, 3], sizes = [4, 1], strides = [1, 1]} : vector<4x9xf32> to vector<4x1xf32>
    %32 = vector.broadcast %31 : vector<4x1xf32> to vector<4x256xf32>
    %33 = arith.mulf %30, %32 : vector<4x256xf32>
    %34 = arith.addf %26, %33 : vector<4x256xf32>
    %35 = vector.extract_strided_slice %2 {offsets = [0, 4], sizes = [4, 1], strides = [1, 1]} : vector<4x9xf32> to vector<4x1xf32>
    %36 = vector.broadcast %35 : vector<4x1xf32> to vector<4x256xf32>
    %37 = arith.mulf %1, %36 : vector<4x256xf32>
    %38 = arith.addf %34, %37 : vector<4x256xf32>
    %c255_i32 = arith.constant 255 : i32
    %39 = tpu.dynamic_rotate %1 by %c255_i32 dim 1 : vector<4x256xf32>, i32 -> vector<4x256xf32>
    %40 = vector.extract_strided_slice %3 {offsets = [5, 0], sizes = [1, 256], strides = [1, 1]} : vector<9x256xf32> to vector<1x256xf32>
    %41 = vector.broadcast %40 : vector<1x256xf32> to vector<4x256xf32>
    %42 = arith.mulf %39, %41 : vector<4x256xf32>
    %43 = vector.extract_strided_slice %2 {offsets = [0, 5], sizes = [4, 1], strides = [1, 1]} : vector<4x9xf32> to vector<4x1xf32>
    %44 = vector.broadcast %43 : vector<4x1xf32> to vector<4x256xf32>
    %45 = arith.mulf %42, %44 : vector<4x256xf32>
    %46 = arith.addf %38, %45 : vector<4x256xf32>
    %c241_i32 = arith.constant 241 : i32
    %47 = tpu.dynamic_rotate %1 by %c241_i32 dim 1 : vector<4x256xf32>, i32 -> vector<4x256xf32>
    %48 = vector.extract_strided_slice %3 {offsets = [6, 0], sizes = [1, 256], strides = [1, 1]} : vector<9x256xf32> to vector<1x256xf32>
    %49 = vector.broadcast %48 : vector<1x256xf32> to vector<4x256xf32>
    %50 = arith.mulf %47, %49 : vector<4x256xf32>
    %51 = vector.extract_strided_slice %2 {offsets = [0, 6], sizes = [4, 1], strides = [1, 1]} : vector<4x9xf32> to vector<4x1xf32>
    %52 = vector.broadcast %51 : vector<4x1xf32> to vector<4x256xf32>
    %53 = arith.mulf %50, %52 : vector<4x256xf32>
    %54 = arith.addf %46, %53 : vector<4x256xf32>
    %c240_i32 = arith.constant 240 : i32
    %55 = tpu.dynamic_rotate %1 by %c240_i32 dim 1 : vector<4x256xf32>, i32 -> vector<4x256xf32>
    %56 = vector.extract_strided_slice %3 {offsets = [7, 0], sizes = [1, 256], strides = [1, 1]} : vector<9x256xf32> to vector<1x256xf32>
    %57 = vector.broadcast %56 : vector<1x256xf32> to vector<4x256xf32>
    %58 = arith.mulf %55, %57 : vector<4x256xf32>
    %59 = vector.extract_strided_slice %2 {offsets = [0, 7], sizes = [4, 1], strides = [1, 1]} : vector<4x9xf32> to vector<4x1xf32>
    %60 = vector.broadcast %59 : vector<4x1xf32> to vector<4x256xf32>
    %61 = arith.mulf %58, %60 : vector<4x256xf32>
    %62 = arith.addf %54, %61 : vector<4x256xf32>
    %c239_i32 = arith.constant 239 : i32
    %63 = tpu.dynamic_rotate %1 by %c239_i32 dim 1 : vector<4x256xf32>, i32 -> vector<4x256xf32>
    %64 = vector.extract_strided_slice %3 {offsets = [8, 0], sizes = [1, 256], strides = [1, 1]} : vector<9x256xf32> to vector<1x256xf32>
    %65 = vector.broadcast %64 : vector<1x256xf32> to vector<4x256xf32>
    %66 = arith.mulf %63, %65 : vector<4x256xf32>
    %67 = vector.extract_strided_slice %2 {offsets = [0, 8], sizes = [4, 1], strides = [1, 1]} : vector<4x9xf32> to vector<4x1xf32>
    %68 = vector.broadcast %67 : vector<4x1xf32> to vector<4x256xf32>
    %69 = arith.mulf %66, %68 : vector<4x256xf32>
    %70 = arith.addf %62, %69 : vector<4x256xf32>
    %71 = vector.extract_strided_slice %70 {offsets = [0, 0], sizes = [1, 256], strides = [1, 1]} : vector<4x256xf32> to vector<1x256xf32>
    %c0_6 = arith.constant 0 : index
    %72 = memref.load %arg4[%c0_6] : memref<16xf32, #tpu.memory_space<smem>>
    %73 = vector.broadcast %72 : f32 to vector<1x256xf32>
    %74 = arith.mulf %71, %73 : vector<1x256xf32>
    %75 = vector.extract_strided_slice %70 {offsets = [1, 0], sizes = [1, 256], strides = [1, 1]} : vector<4x256xf32> to vector<1x256xf32>
    %c1 = arith.constant 1 : index
    %76 = memref.load %arg4[%c1] : memref<16xf32, #tpu.memory_space<smem>>
    %77 = vector.broadcast %76 : f32 to vector<1x256xf32>
    %78 = arith.mulf %75, %77 : vector<1x256xf32>
    %79 = arith.addf %74, %78 : vector<1x256xf32>
    %80 = vector.extract_strided_slice %70 {offsets = [2, 0], sizes = [1, 256], strides = [1, 1]} : vector<4x256xf32> to vector<1x256xf32>
    %c2 = arith.constant 2 : index
    %81 = memref.load %arg4[%c2] : memref<16xf32, #tpu.memory_space<smem>>
    %82 = vector.broadcast %81 : f32 to vector<1x256xf32>
    %83 = arith.mulf %80, %82 : vector<1x256xf32>
    %84 = arith.addf %79, %83 : vector<1x256xf32>
    %85 = vector.extract_strided_slice %70 {offsets = [3, 0], sizes = [1, 256], strides = [1, 1]} : vector<4x256xf32> to vector<1x256xf32>
    %c3 = arith.constant 3 : index
    %86 = memref.load %arg4[%c3] : memref<16xf32, #tpu.memory_space<smem>>
    %87 = vector.broadcast %86 : f32 to vector<1x256xf32>
    %88 = arith.mulf %85, %87 : vector<1x256xf32>
    %89 = arith.addf %84, %88 : vector<1x256xf32>
    %c0_7 = arith.constant 0 : index
    %90 = memref.load %arg5[%c0_7] : memref<4xf32, #tpu.memory_space<smem>>
    %91 = vector.broadcast %90 : f32 to vector<1x256xf32>
    %92 = arith.addf %89, %91 : vector<1x256xf32>
    %93 = vector.extract_strided_slice %70 {offsets = [0, 0], sizes = [1, 256], strides = [1, 1]} : vector<4x256xf32> to vector<1x256xf32>
    %c4 = arith.constant 4 : index
    %94 = memref.load %arg4[%c4] : memref<16xf32, #tpu.memory_space<smem>>
    %95 = vector.broadcast %94 : f32 to vector<1x256xf32>
    %96 = arith.mulf %93, %95 : vector<1x256xf32>
    %97 = vector.extract_strided_slice %70 {offsets = [1, 0], sizes = [1, 256], strides = [1, 1]} : vector<4x256xf32> to vector<1x256xf32>
    %c5 = arith.constant 5 : index
    %98 = memref.load %arg4[%c5] : memref<16xf32, #tpu.memory_space<smem>>
    %99 = vector.broadcast %98 : f32 to vector<1x256xf32>
    %100 = arith.mulf %97, %99 : vector<1x256xf32>
    %101 = arith.addf %96, %100 : vector<1x256xf32>
    %102 = vector.extract_strided_slice %70 {offsets = [2, 0], sizes = [1, 256], strides = [1, 1]} : vector<4x256xf32> to vector<1x256xf32>
    %c6 = arith.constant 6 : index
    %103 = memref.load %arg4[%c6] : memref<16xf32, #tpu.memory_space<smem>>
    %104 = vector.broadcast %103 : f32 to vector<1x256xf32>
    %105 = arith.mulf %102, %104 : vector<1x256xf32>
    %106 = arith.addf %101, %105 : vector<1x256xf32>
    %107 = vector.extract_strided_slice %70 {offsets = [3, 0], sizes = [1, 256], strides = [1, 1]} : vector<4x256xf32> to vector<1x256xf32>
    %c7 = arith.constant 7 : index
    %108 = memref.load %arg4[%c7] : memref<16xf32, #tpu.memory_space<smem>>
    %109 = vector.broadcast %108 : f32 to vector<1x256xf32>
    %110 = arith.mulf %107, %109 : vector<1x256xf32>
    %111 = arith.addf %106, %110 : vector<1x256xf32>
    %c1_8 = arith.constant 1 : index
    %112 = memref.load %arg5[%c1_8] : memref<4xf32, #tpu.memory_space<smem>>
    %113 = vector.broadcast %112 : f32 to vector<1x256xf32>
    %114 = arith.addf %111, %113 : vector<1x256xf32>
    %115 = vector.extract_strided_slice %70 {offsets = [0, 0], sizes = [1, 256], strides = [1, 1]} : vector<4x256xf32> to vector<1x256xf32>
    %c8 = arith.constant 8 : index
    %116 = memref.load %arg4[%c8] : memref<16xf32, #tpu.memory_space<smem>>
    %117 = vector.broadcast %116 : f32 to vector<1x256xf32>
    %118 = arith.mulf %115, %117 : vector<1x256xf32>
    %119 = vector.extract_strided_slice %70 {offsets = [1, 0], sizes = [1, 256], strides = [1, 1]} : vector<4x256xf32> to vector<1x256xf32>
    %c9 = arith.constant 9 : index
    %120 = memref.load %arg4[%c9] : memref<16xf32, #tpu.memory_space<smem>>
    %121 = vector.broadcast %120 : f32 to vector<1x256xf32>
    %122 = arith.mulf %119, %121 : vector<1x256xf32>
    %123 = arith.addf %118, %122 : vector<1x256xf32>
    %124 = vector.extract_strided_slice %70 {offsets = [2, 0], sizes = [1, 256], strides = [1, 1]} : vector<4x256xf32> to vector<1x256xf32>
    %c10 = arith.constant 10 : index
    %125 = memref.load %arg4[%c10] : memref<16xf32, #tpu.memory_space<smem>>
    %126 = vector.broadcast %125 : f32 to vector<1x256xf32>
    %127 = arith.mulf %124, %126 : vector<1x256xf32>
    %128 = arith.addf %123, %127 : vector<1x256xf32>
    %129 = vector.extract_strided_slice %70 {offsets = [3, 0], sizes = [1, 256], strides = [1, 1]} : vector<4x256xf32> to vector<1x256xf32>
    %c11 = arith.constant 11 : index
    %130 = memref.load %arg4[%c11] : memref<16xf32, #tpu.memory_space<smem>>
    %131 = vector.broadcast %130 : f32 to vector<1x256xf32>
    %132 = arith.mulf %129, %131 : vector<1x256xf32>
    %133 = arith.addf %128, %132 : vector<1x256xf32>
    %c2_9 = arith.constant 2 : index
    %134 = memref.load %arg5[%c2_9] : memref<4xf32, #tpu.memory_space<smem>>
    %135 = vector.broadcast %134 : f32 to vector<1x256xf32>
    %136 = arith.addf %133, %135 : vector<1x256xf32>
    %137 = vector.extract_strided_slice %70 {offsets = [0, 0], sizes = [1, 256], strides = [1, 1]} : vector<4x256xf32> to vector<1x256xf32>
    %c12 = arith.constant 12 : index
    %138 = memref.load %arg4[%c12] : memref<16xf32, #tpu.memory_space<smem>>
    %139 = vector.broadcast %138 : f32 to vector<1x256xf32>
    %140 = arith.mulf %137, %139 : vector<1x256xf32>
    %141 = vector.extract_strided_slice %70 {offsets = [1, 0], sizes = [1, 256], strides = [1, 1]} : vector<4x256xf32> to vector<1x256xf32>
    %c13 = arith.constant 13 : index
    %142 = memref.load %arg4[%c13] : memref<16xf32, #tpu.memory_space<smem>>
    %143 = vector.broadcast %142 : f32 to vector<1x256xf32>
    %144 = arith.mulf %141, %143 : vector<1x256xf32>
    %145 = arith.addf %140, %144 : vector<1x256xf32>
    %146 = vector.extract_strided_slice %70 {offsets = [2, 0], sizes = [1, 256], strides = [1, 1]} : vector<4x256xf32> to vector<1x256xf32>
    %c14 = arith.constant 14 : index
    %147 = memref.load %arg4[%c14] : memref<16xf32, #tpu.memory_space<smem>>
    %148 = vector.broadcast %147 : f32 to vector<1x256xf32>
    %149 = arith.mulf %146, %148 : vector<1x256xf32>
    %150 = arith.addf %145, %149 : vector<1x256xf32>
    %151 = vector.extract_strided_slice %70 {offsets = [3, 0], sizes = [1, 256], strides = [1, 1]} : vector<4x256xf32> to vector<1x256xf32>
    %c15 = arith.constant 15 : index
    %152 = memref.load %arg4[%c15] : memref<16xf32, #tpu.memory_space<smem>>
    %153 = vector.broadcast %152 : f32 to vector<1x256xf32>
    %154 = arith.mulf %151, %153 : vector<1x256xf32>
    %155 = arith.addf %150, %154 : vector<1x256xf32>
    %c3_10 = arith.constant 3 : index
    %156 = memref.load %arg5[%c3_10] : memref<4xf32, #tpu.memory_space<smem>>
    %157 = vector.broadcast %156 : f32 to vector<1x256xf32>
    %158 = arith.addf %155, %157 : vector<1x256xf32>
    %159 = tpu.concatenate %92, %114, %136, %158 in 0 : vector<1x256xf32>, vector<1x256xf32>, vector<1x256xf32>, vector<1x256xf32> -> vector<4x256xf32>
    %c0_11 = arith.constant 0 : index
    %c0_12 = arith.constant 0 : index
    %c0_13 = arith.constant 0 : index
    %160 = vector.load %arg6[%c0_11, %c0_12, %c0_13] : memref<1x4x256xf32, #tpu.memory_space<vmem>>, vector<1x4x256xf32>
    %161 = vector.shape_cast %160 : vector<1x4x256xf32> to vector<4x256xf32>
    %162 = vector.shape_cast %159 : vector<4x256xf32> to vector<1x4x256xf32>
    tpu.vector_store %arg6[%c0_11, %c0_12, %c0_13], %162 {strides = array<i32>} : memref<1x4x256xf32, #tpu.memory_space<vmem>>, vector<1x4x256xf32>,
    return
  }
  func.func @transform_0(%arg0: i32) -> (i32, i32, i32) {
    %c0_i32 = arith.constant 0 : i32
    %c0_i32_0 = arith.constant 0 : i32
    %c0_i32_1 = arith.constant 0 : i32
    return %arg0, %c0_i32, %c0_i32_0 : i32, i32, i32
  }
  func.func @transform_1(%arg0: i32) -> (i32, i32) {
    %c0_i32 = arith.constant 0 : i32
    %c0_i32_0 = arith.constant 0 : i32
    %c0_i32_1 = arith.constant 0 : i32
    return %c0_i32, %c0_i32_0 : i32, i32
  }
  func.func @transform_2(%arg0: i32) -> (i32, i32) {
    %c0_i32 = arith.constant 0 : i32
    %c0_i32_0 = arith.constant 0 : i32
    %c0_i32_1 = arith.constant 0 : i32
    return %c0_i32, %c0_i32_0 : i32, i32
  }
  func.func @transform_3(%arg0: i32) -> i32 {
    %c0_i32 = arith.constant 0 : i32
    %c0_i32_0 = arith.constant 0 : i32
    return %c0_i32 : i32
  }
  func.func @transform_4(%arg0: i32) -> i32 {
    %c0_i32 = arith.constant 0 : i32
    %c0_i32_0 = arith.constant 0 : i32
    return %c0_i32 : i32
  }
  func.func @transform_5(%arg0: i32) -> (i32, i32, i32) {
    %c0_i32 = arith.constant 0 : i32
    %c0_i32_0 = arith.constant 0 : i32
    %c0_i32_1 = arith.constant 0 : i32
    return %arg0, %c0_i32, %c0_i32_0 : i32, i32, i32
  }
}

</mosaic_0001>

<llo_original>
// kernel: tpu_custom_call.1
$region0: #{tpu_custom_call.1}
  #allocation0 [shape = 'u32[]', space=smem, size = 0x4, offset = 0x4, fixed_abs, tag = 'smem constant byte address 0x4 - core index']
  #allocation1 [shape = 'u32[144,128]{1,0:T(1,128)}', space=vmem, size = 0x12000, scoped, tag = 'internal scratch']
  %s0 = inlined_call_operand.hbm [shape: f32[2,4,256], index: 0, kind: input, shape index: {}]
  %s1 = inlined_call_operand.hbm [shape: f32[4,9], index: 1, kind: input, shape index: {}]
  %s2 = inlined_call_operand.hbm [shape: f32[9,256], index: 2, kind: input, shape index: {}]
  %s3 = inlined_call_operand.vmem [shape: f32[16], index: 3, kind: input, shape index: {}]
  %s4 = inlined_call_operand.vmem [shape: f32[4], index: 4, kind: input, shape index: {}]
  %s5 = inlined_call_operand.hbm [shape: f32[2,4,256], index: 5, kind: output, shape index: {}]
  %s6 = sld [smem:[#allocation0]]
  $region73: #{tpu_custom_call.1} parent=0
    _
  %s8 = ssub.s32 1, %s6
  %s9 = scalar_select 0, %s8, %s6
  $region1: #{tpu_custom_call.1} parent=0
    #allocation2 [shape = 'u8[8192]{0}', space=vmem, size = 0x2000, scoped, tag = 'input window, operand 0']
    #allocation3 [shape = 's32[2]{0}', space=sflag, size = 0x8, scoped, tag = 'scoped memory for tpu_custom_call.1']
    #allocation4 [shape = 's32[2]{0}', space=sflag, size = 0x8, scoped, tag = 'scoped memory for tpu_custom_call.1']
    #allocation5 [shape = 's32[2]{0}', space=sflag, size = 0x8, scoped, tag = 'scoped memory for tpu_custom_call.1']
    #allocation6 [shape = 'u8[2048]{0}', space=vmem, size = 0x800, scoped, tag = 'input window, operand 1, single buffered']
    #allocation7 [shape = 's32[1]{0}', space=sflag, size = 0x4, scoped, tag = 'scoped memory for tpu_custom_call.1']
    #allocation8 [shape = 'u8[16384]{0}', space=vmem, size = 0x4000, scoped, tag = 'input window, operand 2, single buffered']
    #allocation9 [shape = 'u8[512]{0}', space=smem, size = 0x200, scoped, tag = 'input window, operand 3, single buffered']
    #allocation10 [shape = 'u8[512]{0}', space=smem, size = 0x200, scoped, tag = 'input window, operand 4, single buffered']
    #allocation11 [shape = 's32[1]{0}', space=sflag, size = 0x4, scoped, tag = 'scoped memory for tpu_custom_call.1']
    #allocation12 [shape = 'u8[8192]{0}', space=vmem, size = 0x2000, scoped, tag = 'output window, operand 0']
    %10 = vsyncpa [#allocation3], 0
    %s11 = scalar_lea.sflag [#allocation3], 1
    %12 = vsyncpa %s11, 0
    %13 = vsyncpa [#allocation7], 0
    %14 = vsyncpa [#allocation5], 0
    %15 = vsyncpa [#allocation11], 0
    %16 = vsyncpa [#allocation4], 0
    %s17 = scalar_lea.sflag [#allocation4], 1
    %18 = vsyncpa %s17, 0
    loop: start=0, step=1, limit=4
    $region2: #{tpu_custom_call.1} parent=1 // loop_pre_header
      _
    $region3: #{tpu_custom_call.1} parent=1 // loop_header
      %s20 = sphi 0, %s24
      %p21 = scmp.ge.s32.totalorder %s20, 4
      %s30 = sphi 0, %s32
      %s33 = sphi 0, %s30
      %s34 = sphi 0, %s33
      %s50 = sphi 0, %s34
      %s54 = sphi 0, %s54
      %s56 = sphi 0, %s54
      %s57 = sphi 0, %s56
      %s71 = sphi 0, %s57
      %s75 = sphi 0, %s75
      %s77 = sphi 0, %s75
      %s78 = sphi 0, %s77
      %s92 = sphi 0, %s78
      %s96 = sphi 0, %s96
      %s98 = sphi 0, %s96
      %s99 = sphi 0, %s98
      %s113 = sphi 0, %s99
      %s117 = sphi 0, %s117
      %s119 = sphi 0, %s117
      %s120 = sphi 0, %s119
      %s134 = sphi 0, %s120
      %s140 = sphi 0, %s142
      %s143 = sphi 0, %s140
      %s144 = sphi 0, %s143
      %s160 = sphi 0, %s144
    $region4: #{tpu_custom_call.1} parent=1 // loop_header_branch
      %23 = sbr.rel (%p21) target = $region8
    $region5: #{tpu_custom_call.1} parent=1 // loop_body
      %s25 = ssub.s32 %s20, 1
      %s26 = ssub.s32 %s20, 2
      %s27 = sadd.s32 %s20, 1
      %s28 = ssub.s32 %s20, %s27
      %p29 = scmp.eq.s32.totalorder %s28, 0
      %s31 = sadd.s32 %s30, 1
      %s32 = scalar_select %p29, %s30, %s31
      %p35 = pneg %p29
      %p36 = scmp.eq.s32.totalorder %s20, 1
      %p37 = por %p35, %p36
      %p38 = scmp.ne.s32.totalorder %s30, %s33
      %p39 = scmp.eq.s32.totalorder %s20, 0
      %p40 = por %p38, %p39
      %p41 = scmp.ne.s32.totalorder %s30, %s33
      %p42 = scmp.eq.s32.totalorder %s25, 1
      %p43 = por %p41, %p42
      %p44 = scmp.ne.s32.totalorder %s33, %s34
      %p45 = scmp.eq.s32.totalorder %s25, 0
      %p46 = por %p44, %p45
      %p47 = scmp.ne.s32.totalorder %s33, %s34
      %p48 = scmp.eq.s32.totalorder %s26, 1
      %p49 = por %p47, %p48
      %p51 = scmp.ne.s32.totalorder %s34, %s50
      %p52 = scmp.eq.s32.totalorder %s26, 0
      %p53 = por %p51, %p52
      %s55 = sadd.s32 %s54, 1
      %p58 = scmp.eq.s32.totalorder %s20, 1
      %p59 = scmp.ne.s32.totalorder %s54, %s56
      %p60 = scmp.eq.s32.totalorder %s20, 0
      %p61 = por %p59, %p60
      %p62 = scmp.ne.s32.totalorder %s54, %s56
      %p63 = scmp.eq.s32.totalorder %s25, 1
      %p64 = por %p62, %p63
      %p65 = scmp.ne.s32.totalorder %s56, %s57
      %p66 = scmp.eq.s32.totalorder %s25, 0
      %p67 = por %p65, %p66
      %p68 = scmp.ne.s32.totalorder %s56, %s57
      %p69 = scmp.eq.s32.totalorder %s26, 1
      %p70 = por %p68, %p69
      %p72 = scmp.ne.s32.totalorder %s57, %s71
      %p73 = scmp.eq.s32.totalorder %s26, 0
      %p74 = por %p72, %p73
      %s76 = sadd.s32 %s75, 1
      %p79 = scmp.eq.s32.totalorder %s20, 1
      %p80 = scmp.ne.s32.totalorder %s75, %s77
      %p81 = scmp.eq.s32.totalorder %s20, 0
      %p82 = por %p80, %p81
      %p83 = scmp.ne.s32.totalorder %s75, %s77
      %p84 = scmp.eq.s32.totalorder %s25, 1
      %p85 = por %p83, %p84
      %p86 = scmp.ne.s32.totalorder %s77, %s78
      %p87 = scmp.eq.s32.totalorder %s25, 0
      %p88 = por %p86, %p87
      %p89 = scmp.ne.s32.totalorder %s77, %s78
      %p90 = scmp.eq.s32.totalorder %s26, 1
      %p91 = por %p89, %p90
      %p93 = scmp.ne.s32.totalorder %s78, %s92
      %p94 = scmp.eq.s32.totalorder %s26, 0
      %p95 = por %p93, %p94
      %s97 = sadd.s32 %s96, 1
      %p100 = scmp.eq.s32.totalorder %s20, 1
      %p101 = scmp.ne.s32.totalorder %s96, %s98
      %p102 = scmp.eq.s32.totalorder %s20, 0
      %p103 = por %p101, %p102
      %p104 = scmp.ne.s32.totalorder %s96, %s98
      %p105 = scmp.eq.s32.totalorder %s25, 1
      %p106 = por %p104, %p105
      %p107 = scmp.ne.s32.totalorder %s98, %s99
      %p108 = scmp.eq.s32.totalorder %s25, 0
      %p109 = por %p107, %p108
      %p110 = scmp.ne.s32.totalorder %s98, %s99
      %p111 = scmp.eq.s32.totalorder %s26, 1
      %p112 = por %p110, %p111
      %p114 = scmp.ne.s32.totalorder %s99, %s113
      %p115 = scmp.eq.s32.totalorder %s26, 0
      %p116 = por %p114, %p115
      %s118 = sadd.s32 %s117, 1
      %p121 = scmp.eq.s32.totalorder %s20, 1
      %p122 = scmp.ne.s32.totalorder %s117, %s119
      %p123 = scmp.eq.s32.totalorder %s20, 0
      %p124 = por %p122, %p123
      %p125 = scmp.ne.s32.totalorder %s117, %s119
      %p126 = scmp.eq.s32.totalorder %s25, 1
      %p127 = por %p125, %p126
      %p128 = scmp.ne.s32.totalorder %s119, %s120
      %p129 = scmp.eq.s32.totalorder %s25, 0
      %p130 = por %p128, %p129
      %p131 = scmp.ne.s32.totalorder %s119, %s120
      %p132 = scmp.eq.s32.totalorder %s26, 1
      %p133 = por %p131, %p132
      %p135 = scmp.ne.s32.totalorder %s120, %s134
      %p136 = scmp.eq.s32.totalorder %s26, 0
      %p137 = por %p135, %p136
      %s138 = ssub.s32 %s20, %s27
      %p139 = scmp.eq.s32.totalorder %s138, 0
      %s141 = sadd.s32 %s140, 1
      %s142 = scalar_select %p139, %s140, %s141
      %p145 = pneg %p139
      %p146 = scmp.eq.s32.totalorder %s20, 1
      %p147 = por %p145, %p146
      %p148 = scmp.ne.s32.totalorder %s140, %s143
      %p149 = scmp.eq.s32.totalorder %s20, 0
      %p150 = por %p148, %p149
      %p151 = scmp.ne.s32.totalorder %s140, %s143
      %p152 = scmp.eq.s32.totalorder %s25, 1
      %p153 = por %p151, %p152
      %p154 = scmp.ne.s32.totalorder %s143, %s144
      %p155 = scmp.eq.s32.totalorder %s25, 0
      %p156 = por %p154, %p155
      %p157 = scmp.ne.s32.totalorder %s143, %s144
      %p158 = scmp.eq.s32.totalorder %s26, 1
      %p159 = por %p157, %p158
      %p161 = scmp.ne.s32.totalorder %s144, %s160
      %p162 = scmp.eq.s32.totalorder %s26, 0
      %p163 = por %p161, %p162
      %p164 = scmp.le.s32.totalorder 1, %s20
      %p165 = scmp.lt.s32.totalorder %s20, 3
      %p166 = pnand %p164, %p165
      %p167 = pneg %p166
      // Predicated region
      $region9: #{tpu_custom_call.1} parent=5 // pred_check
        _
      $region10: #{tpu_custom_call.1} parent=5 // pred_check_branch
        %169 = sbr.rel (%p166) target = $region12
      $region11: #{tpu_custom_call.1} parent=5 // pred_region
        %s170 = ssub.s32 %s20, 1
        // Predicated region
        $region13: #{tpu_custom_call.1} parent=11 // pred_check
          %p171 = pneg %p67
        $region14: #{tpu_custom_call.1} parent=11 // pred_check_branch
          %173 = sbr.rel (%p171) target = $region16
        $region15: #{tpu_custom_call.1} parent=11 // pred_region
          %s175 = ssub.s32 64, 64
          %176 = vsyncadd [#allocation7], %s175
          %s178 = sshll.u32 [#allocation6], 4
          %s179 = int_to_ptr.vmem [resolvable:$true] %s178
          %181 = dma.hbm_to_vmem [thread:$0]  %s1, 64, %s179, [#allocation7]
        $region16: #{tpu_custom_call.1} parent=11 // pred_fallthru
          _
        // Predicated region
        $region17: #{tpu_custom_call.1} parent=11 // pred_check
          %p182 = pneg %p88
        $region18: #{tpu_custom_call.1} parent=11 // pred_check_branch
          %184 = sbr.rel (%p182) target = $region20
        $region19: #{tpu_custom_call.1} parent=11 // pred_region
          %s186 = ssub.s32 512, 512
          %187 = vsyncadd [#allocation7], %s186
          %s188 = sshll.u32 [#allocation8], 4
          %s189 = int_to_ptr.vmem [resolvable:$true] %s188
          %194 = dma.hbm_to_vmem [thread:$0]  %s2, 512, %s189, [#allocation7], 256, 256, 16
        $region20: #{tpu_custom_call.1} parent=11 // pred_fallthru
          _
        // Predicated region
        $region21: #{tpu_custom_call.1} parent=11 // pred_check
          %p195 = pneg %p109
        $region22: #{tpu_custom_call.1} parent=11 // pred_check_branch
          %197 = sbr.rel (%p195) target = $region24
        $region23: #{tpu_custom_call.1} parent=11 // pred_region
          %s199 = ssub.s32 16, 16
          %200 = vsyncadd [#allocation5], %s199
          %s202 = sshll.u32 %s3, 4
          %s203 = int_to_ptr.vmem [resolvable:$true] %s202
          %205 = dma.vmem_to_smem %s203, 16, [#allocation9], [#allocation5]
        $region24: #{tpu_custom_call.1} parent=11 // pred_fallthru
          _
        // Predicated region
        $region25: #{tpu_custom_call.1} parent=11 // pred_check
          %p206 = pneg %p130
        $region26: #{tpu_custom_call.1} parent=11 // pred_check_branch
          %208 = sbr.rel (%p206) target = $region28
        $region27: #{tpu_custom_call.1} parent=11 // pred_region
          %s210 = ssub.s32 16, 16
          %211 = vsyncadd [#allocation11], %s210
          %s213 = sshll.u32 %s4, 4
          %s214 = int_to_ptr.vmem [resolvable:$true] %s213
          %216 = dma.vmem_to_smem %s214, 16, [#allocation10], [#allocation11]
        $region28: #{tpu_custom_call.1} parent=11 // pred_fallthru
          _
      $region12: #{tpu_custom_call.1} parent=5 // pred_fallthru
        _
      %p217 = scmp.lt.s32.totalorder %s20, 2
      // Predicated region
      $region29: #{tpu_custom_call.1} parent=5 // pred_check
        %p218 = pneg %p217
      $region30: #{tpu_custom_call.1} parent=5 // pred_check_branch
        %220 = sbr.rel (%p218) target = $region32
      $region31: #{tpu_custom_call.1} parent=5 // pred_region
        // Predicated region
        $region33: #{tpu_custom_call.1} parent=31 // pred_check
          %p221 = pneg %p40
        $region34: #{tpu_custom_call.1} parent=31 // pred_check_branch
          %223 = sbr.rel (%p221) target = $region36
        $region35: #{tpu_custom_call.1} parent=31 // pred_region
          %s224 = sand.u32 %s30, 1
          %s225 = scalar_lea.sflag [#allocation3], %s224
          %s226 = sand.u32 %s30, 1
          %s227 = smul.addr %s226, 8
          %s228 = scalar_lea.vmem [#allocation2], %s227
          %s230 = ssub.s32 128, 128
          %231 = vsyncadd %s225, %s230
          %s232 = smul.addr %s20, 2
          %s233 = smul.addr %s232, 64
          %s234 = scalar_lea.hbm %s0, %s233
          %s236 = sshll.u32 %s228, 4
          %s237 = int_to_ptr.vmem [resolvable:$true] %s236
          %239 = dma.hbm_to_vmem [thread:$0]  %s234, 128, %s237, %s225
        $region36: #{tpu_custom_call.1} parent=31 // pred_fallthru
          _
      $region32: #{tpu_custom_call.1} parent=5 // pred_fallthru
        _
      %p240 = scmp.le.s32.totalorder 1, %s20
      %p241 = scmp.lt.s32.totalorder %s20, 3
      %p242 = pnand %p240, %p241
      %p243 = pneg %p242
      // Predicated region
      $region37: #{tpu_custom_call.1} parent=5 // pred_check
        _
      $region38: #{tpu_custom_call.1} parent=5 // pred_check_branch
        %245 = sbr.rel (%p242) target = $region40
      $region39: #{tpu_custom_call.1} parent=5 // pred_region
        %s246 = ssub.s32 %s20, 1
        %s247 = sand.u32 %s33, 1
        %s248 = scalar_lea.sflag [#allocation3], %s247
        %s249 = sand.u32 %s33, 1
        %s250 = smul.addr %s249, 8
        %s251 = scalar_lea.vmem [#allocation2], %s250
        // Predicated region
        $region41: #{tpu_custom_call.1} parent=39 // pred_check
          %p252 = pneg %p46
        $region42: #{tpu_custom_call.1} parent=39 // pred_check_branch
          %254 = sbr.rel (%p252) target = $region44
        $region43: #{tpu_custom_call.1} parent=39 // pred_region
          %255 = dma.done %s248, 128
        $region44: #{tpu_custom_call.1} parent=39 // pred_fallthru
          _
        // Predicated region
        $region45: #{tpu_custom_call.1} parent=39 // pred_check
          %p256 = pneg %p67
        $region46: #{tpu_custom_call.1} parent=39 // pred_check_branch
          %258 = sbr.rel (%p256) target = $region48
        $region47: #{tpu_custom_call.1} parent=39 // pred_region
          %259 = dma.done [#allocation7], 64
        $region48: #{tpu_custom_call.1} parent=39 // pred_fallthru
          _
        // Predicated region
        $region49: #{tpu_custom_call.1} parent=39 // pred_check
          %p260 = pneg %p88
        $region50: #{tpu_custom_call.1} parent=39 // pred_check_branch
          %262 = sbr.rel (%p260) target = $region52
        $region51: #{tpu_custom_call.1} parent=39 // pred_region
          %263 = dma.done [#allocation7], 512
        $region52: #{tpu_custom_call.1} parent=39 // pred_fallthru
          _
        // Predicated region
        $region53: #{tpu_custom_call.1} parent=39 // pred_check
          %p264 = pneg %p109
        $region54: #{tpu_custom_call.1} parent=39 // pred_check_branch
          %266 = sbr.rel (%p264) target = $region56
        $region55: #{tpu_custom_call.1} parent=39 // pred_region
          %267 = dma.done [#allocation5], 16
        $region56: #{tpu_custom_call.1} parent=39 // pred_fallthru
          _
        // Predicated region
        $region57: #{tpu_custom_call.1} parent=39 // pred_check
          %p268 = pneg %p130
        $region58: #{tpu_custom_call.1} parent=39 // pred_check_branch
          %270 = sbr.rel (%p268) target = $region60
        $region59: #{tpu_custom_call.1} parent=39 // pred_region
          %271 = dma.done [#allocation11], 16
        $region60: #{tpu_custom_call.1} parent=39 // pred_fallthru
          _
        %272 = sfence
        %s273 = sand.u32 %s33, 1
        %s274 = scalar_lea.sflag [#allocation3], %s273
        %s275 = sand.u32 %s33, 1
        %s276 = smul.addr %s275, 8
        %s277 = scalar_lea.vmem [#allocation2], %s276
        %p278 = pneg %p46
        %p279 = pneg %p43
        %p280 = pneg %p67
        %p281 = pneg %p64
        %p282 = pneg %p88
        %p283 = pneg %p85
        %p284 = pneg %p109
        %p285 = pneg %p106
        %p286 = pneg %p130
        %p287 = pneg %p127
        %p288 = pneg %p156
        %p289 = pneg %p153
        %s290 = sand.u32 %s143, 1
        %s291 = scalar_lea.sflag [#allocation4], %s290
        %s292 = sand.u32 %s143, 1
        %s293 = smul.addr %s292, 8
        %s294 = scalar_lea.vmem [#allocation12], %s293
        %v295 = vld [vmem:[%s251] sm:$0xff]
        %v296 = vld [vmem:[#allocation6] sm:$0xf]
        %v297 = vld [vmem:[#allocation8] sm:$0xff]
        %v298 = vld [vmem:[#allocation8 + $0x8] sm:$0xff]
        %v299 = vld [vmem:[#allocation8 + $0x10] sm:$0x1]
        %v300 = vld [vmem:[#allocation8 + $0x18] sm:$0x1]
        %v302 = vcombine.high %v295, %v295
        %304 = vrot.lane.b32.xlu0 %v295, 17
        %v305 = vpop.permute.xlu0 %304
        %306 = vrot.lane.b32.xlu0 %v302, 17
        %v307 = vpop.permute.xlu0 %306
        %v308 = vlaneseq
        %v309 = vand.u32 %v308, 127
        %vm310 = vcmp.lt.s32.totalorder %v309, 17
        %v311 = vsel %vm310, %v305, %v307
        %v312 = vsel %vm310, %v307, %v305
        %v313 = vlaneseq
        %v314 = vshrl.u32 %v313, 7
        %v315 = vsub.s32 0, %v314
        %v316 = vrot.slane %v297, %v315
        %v317 = vlaneseq
        %v318 = vshrl.u32 %v317, 7
        %v319 = vsub.s32 0, %v318
        %v320 = vrot.slane %v298, %v319
        %v321 = vmul.f32 %v312, %v316
        %v322 = vmul.f32 %v311, %v320
        %324 = vset.pattern.permute.xlu0 0
        %325 = vperm.xlu0 %324, %v296
        %v326 = vpop.permute.xlu0 %325
        %v328 = vmul.f32 %v321, %v326
        %v329 = vmul.f32 %v322, %v326
        %330 = vrot.lane.b32.xlu0 %v295, 16
        %v331 = vpop.permute.xlu0 %330
        %332 = vrot.lane.b32.xlu0 %v302, 16
        %v333 = vpop.permute.xlu0 %332
        %vm334 = vcmp.lt.s32.totalorder %v309, 16
        %v335 = vsel %vm334, %v331, %v333
        %v336 = vsel %vm334, %v333, %v331
        %v337 = vlaneseq
        %v338 = vshrl.u32 %v337, 7
        %v339 = vsub.s32 1, %v338
        %v340 = vrot.slane %v297, %v339
        %v341 = vlaneseq
        %v342 = vshrl.u32 %v341, 7
        %v343 = vsub.s32 1, %v342
        %v344 = vrot.slane %v298, %v343
        %v345 = vmul.f32 %v336, %v340
        %v346 = vmul.f32 %v335, %v344
        %347 = vset.pattern.permute.xlu0 1
        %348 = vperm.xlu0 %347, %v296
        %v349 = vpop.permute.xlu0 %348
        %v351 = vmul.f32 %v345, %v349
        %v352 = vmul.f32 %v346, %v349
        %v353 = vadd.f32 %v328, %v351
        %v354 = vadd.f32 %v329, %v352
        %355 = vrot.lane.b32.xlu0 %v295, 15
        %v356 = vpop.permute.xlu0 %355
        %357 = vrot.lane.b32.xlu0 %v302, 15
        %v358 = vpop.permute.xlu0 %357
        %vm359 = vcmp.lt.s32.totalorder %v309, 15
        %v360 = vsel %vm359, %v356, %v358
        %v361 = vsel %vm359, %v358, %v356
        %v362 = vlaneseq
        %v363 = vshrl.u32 %v362, 7
        %v364 = vsub.s32 2, %v363
        %v365 = vrot.slane %v297, %v364
        %v366 = vlaneseq
        %v367 = vshrl.u32 %v366, 7
        %v368 = vsub.s32 2, %v367
        %v369 = vrot.slane %v298, %v368
        %v370 = vmul.f32 %v361, %v365
        %v371 = vmul.f32 %v360, %v369
        %372 = vset.pattern.permute.xlu0 2
        %373 = vperm.xlu0 %372, %v296
        %v374 = vpop.permute.xlu0 %373
        %v376 = vmul.f32 %v370, %v374
        %v377 = vmul.f32 %v371, %v374
        %v378 = vadd.f32 %v353, %v376
        %v379 = vadd.f32 %v354, %v377
        %380 = vrot.lane.b32.xlu0 %v295, 1
        %v381 = vpop.permute.xlu0 %380
        %382 = vrot.lane.b32.xlu0 %v302, 1
        %v383 = vpop.permute.xlu0 %382
        %vm384 = vcmp.lt.s32.totalorder %v309, 1
        %v385 = vsel %vm384, %v381, %v383
        %v386 = vsel %vm384, %v383, %v381
        %v387 = vlaneseq
        %v388 = vshrl.u32 %v387, 7
        %v389 = vsub.s32 3, %v388
        %v390 = vrot.slane %v297, %v389
        %v391 = vlaneseq
        %v392 = vshrl.u32 %v391, 7
        %v393 = vsub.s32 3, %v392
        %v394 = vrot.slane %v298, %v393
        %v395 = vmul.f32 %v386, %v390
        %v396 = vmul.f32 %v385, %v394
        %397 = vset.pattern.permute.xlu0 3
        %398 = vperm.xlu0 %397, %v296
        %v399 = vpop.permute.xlu0 %398
        %v401 = vmul.f32 %v395, %v399
        %v402 = vmul.f32 %v396, %v399
        %v403 = vadd.f32 %v378, %v401
        %v404 = vadd.f32 %v379, %v402
        %405 = vset.pattern.permute.xlu0 4
        %406 = vperm.xlu0 %405, %v296
        %v407 = vpop.permute.xlu0 %406
        %v409 = vunpack.c.l.s4 839922192
        %v410 = vunpack.c.0.s8 %v409
        %v411 = vlaneseq
        %v412 = vshrl.u32 %v411, 7
        %v413 = vsub.s32 %v410, %v412
        %v414 = vrot.slane %v407, %v413
        %v416 = vmul.f32 %v295, %v414
        %v418 = vcombine.high %v416, %v416
        %v420 = vadd.f32 %v403, %v416
        %v421 = vadd.f32 %v404, %v418
        %422 = vrot.lane.b32.xlu0 %v295, 127
        %v423 = vpop.permute.xlu0 %422
        %424 = vrot.lane.b32.xlu0 %v302, 127
        %v425 = vpop.permute.xlu0 %424
        %vm426 = vcmp.lt.s32.totalorder %v309, 127
        %v427 = vsel %vm426, %v423, %v425
        %v428 = vsel %vm426, %v425, %v423
        %v429 = vlaneseq
        %v430 = vshrl.u32 %v429, 7
        %v431 = vsub.s32 5, %v430
        %v432 = vrot.slane %v297, %v431
        %v433 = vlaneseq
        %v434 = vshrl.u32 %v433, 7
        %v435 = vsub.s32 5, %v434
        %v436 = vrot.slane %v298, %v435
        %v437 = vmul.f32 %v427, %v432
        %v438 = vmul.f32 %v428, %v436
        %439 = vset.pattern.permute.xlu0 5
        %440 = vperm.xlu0 %439, %v296
        %v441 = vpop.permute.xlu0 %440
        %v443 = vmul.f32 %v437, %v441
        %v444 = vmul.f32 %v438, %v441
        %v445 = vadd.f32 %v420, %v443
        %v446 = vadd.f32 %v421, %v444
        %447 = vrot.lane.b32.xlu0 %v295, 113
        %v448 = vpop.permute.xlu0 %447
        %449 = vrot.lane.b32.xlu0 %v302, 113
        %v450 = vpop.permute.xlu0 %449
        %vm451 = vcmp.lt.s32.totalorder %v309, 113
        %v452 = vsel %vm451, %v448, %v450
        %v453 = vsel %vm451, %v450, %v448
        %v454 = vlaneseq
        %v455 = vshrl.u32 %v454, 7
        %v456 = vsub.s32 6, %v455
        %v457 = vrot.slane %v297, %v456
        %v458 = vlaneseq
        %v459 = vshrl.u32 %v458, 7
        %v460 = vsub.s32 6, %v459
        %v461 = vrot.slane %v298, %v460
        %v462 = vmul.f32 %v452, %v457
        %v463 = vmul.f32 %v453, %v461
        %464 = vset.pattern.permute.xlu0 6
        %465 = vperm.xlu0 %464, %v296
        %v466 = vpop.permute.xlu0 %465
        %v468 = vmul.f32 %v462, %v466
        %v469 = vmul.f32 %v463, %v466
        %v470 = vadd.f32 %v445, %v468
        %v471 = vadd.f32 %v446, %v469
        %472 = vrot.lane.b32.xlu0 %v295, 112
        %v473 = vpop.permute.xlu0 %472
        %474 = vrot.lane.b32.xlu0 %v302, 112
        %v475 = vpop.permute.xlu0 %474
        %vm476 = vcmp.lt.s32.totalorder %v309, 112
        %v477 = vsel %vm476, %v473, %v475
        %v478 = vsel %vm476, %v475, %v473
        %v479 = vlaneseq
        %v480 = vshrl.u32 %v479, 7
        %v481 = vsub.s32 7, %v480
        %v482 = vrot.slane %v297, %v481
        %v483 = vlaneseq
        %v484 = vshrl.u32 %v483, 7
        %v485 = vsub.s32 7, %v484
        %v486 = vrot.slane %v298, %v485
        %v487 = vmul.f32 %v477, %v482
        %v488 = vmul.f32 %v478, %v486
        %489 = vset.pattern.permute.xlu0 7
        %490 = vperm.xlu0 %489, %v296
        %v491 = vpop.permute.xlu0 %490
        %v493 = vmul.f32 %v487, %v491
        %v494 = vmul.f32 %v488, %v491
        %v495 = vadd.f32 %v470, %v493
        %v496 = vadd.f32 %v471, %v494
        %497 = vrot.lane.b32.xlu0 %v295, 111
        %v498 = vpop.permute.xlu0 %497
        %499 = vrot.lane.b32.xlu0 %v302, 111
        %v500 = vpop.permute.xlu0 %499
        %vm501 = vcmp.lt.s32.totalorder %v309, 111
        %v502 = vsel %vm501, %v498, %v500
        %v503 = vsel %vm501, %v500, %v498
        %v504 = vlaneseq
        %v505 = vshrl.u32 %v504, 7
        %v506 = vsub.s32 0, %v505
        %v507 = vrot.slane %v299, %v506
        %v508 = vlaneseq
        %v509 = vshrl.u32 %v508, 7
        %v510 = vsub.s32 0, %v509
        %v511 = vrot.slane %v300, %v510
        %v512 = vmul.f32 %v502, %v507
        %v513 = vmul.f32 %v503, %v511
        %514 = vset.pattern.permute.xlu0 8
        %515 = vperm.xlu0 %514, %v296
        %v516 = vpop.permute.xlu0 %515
        %v518 = vmul.f32 %v512, %v516
        %v519 = vmul.f32 %v513, %v516
        %v520 = vadd.f32 %v495, %v518
        %v521 = vadd.f32 %v496, %v519
        %s522 = sld [smem:[#allocation9]]
        %v523 = vstv %s522
        %v524 = vmul.f32 %v520, %v523
        %v525 = vmul.f32 %v521, %v523
        %s526 = sld [smem:[#allocation9 + $0x1]]
        %v527 = vstv %s526
        %v528 = vmul.f32 %v520, %v527
        %v529 = vmul.f32 %v521, %v527
        %v532 = vrot.slane %v528, 1
        %v533 = vrot.slane %v529, 1
        %v536 = vadd.f32 %v524, %v532
        %v537 = vadd.f32 %v525, %v533
        %s538 = sld [smem:[#allocation9 + $0x2]]
        %v539 = vstv %s538
        %v540 = vmul.f32 %v520, %v539
        %v541 = vmul.f32 %v521, %v539
        %v544 = vrot.slane %v540, 2
        %v545 = vrot.slane %v541, 2
        %v548 = vadd.f32 %v536, %v544
        %v549 = vadd.f32 %v537, %v545
        %s550 = sld [smem:[#allocation9 + $0x3]]
        %v551 = vstv %s550
        %v552 = vmul.f32 %v520, %v551
        %v553 = vmul.f32 %v521, %v551
        %v556 = vrot.slane %v552, 3
        %v557 = vrot.slane %v553, 3
        %v560 = vadd.f32 %v548, %v556
        %v561 = vadd.f32 %v549, %v557
        %s562 = sld [smem:[#allocation10]]
        %v563 = vstv %s562
        %v564 = vadd.f32 %v560, %v563
        %v565 = vadd.f32 %v561, %v563
        %s566 = sld [smem:[#allocation9 + $0x4]]
        %v567 = vstv %s566
        %v568 = vmul.f32 %v520, %v567
        %v569 = vmul.f32 %v521, %v567
        %s570 = sld [smem:[#allocation9 + $0x5]]
        %v571 = vstv %s570
        %v572 = vmul.f32 %v520, %v571
        %v573 = vmul.f32 %v521, %v571
        %v576 = vrot.slane %v572, 1
        %v577 = vrot.slane %v573, 1
        %v580 = vadd.f32 %v568, %v576
        %v581 = vadd.f32 %v569, %v577
        %s582 = sld [smem:[#allocation9 + $0x6]]
        %v583 = vstv %s582
        %v584 = vmul.f32 %v520, %v583
        %v585 = vmul.f32 %v521, %v583
        %v588 = vrot.slane %v584, 2
        %v589 = vrot.slane %v585, 2
        %v592 = vadd.f32 %v580, %v588
        %v593 = vadd.f32 %v581, %v589
        %s594 = sld [smem:[#allocation9 + $0x7]]
        %v595 = vstv %s594
        %v596 = vmul.f32 %v520, %v595
        %v597 = vmul.f32 %v521, %v595
        %v600 = vrot.slane %v596, 3
        %v601 = vrot.slane %v597, 3
        %v604 = vadd.f32 %v592, %v600
        %v605 = vadd.f32 %v593, %v601
        %s606 = sld [smem:[#allocation10 + $0x1]]
        %v607 = vstv %s606
        %v608 = vadd.f32 %v604, %v607
        %v609 = vadd.f32 %v605, %v607
        %s610 = sld [smem:[#allocation9 + $0x8]]
        %v611 = vstv %s610
        %v612 = vmul.f32 %v520, %v611
        %v613 = vmul.f32 %v521, %v611
        %s614 = sld [smem:[#allocation9 + $0x9]]
        %v615 = vstv %s614
        %v616 = vmul.f32 %v520, %v615
        %v617 = vmul.f32 %v521, %v615
        %v620 = vrot.slane %v616, 1
        %v621 = vrot.slane %v617, 1
        %v624 = vadd.f32 %v612, %v620
        %v625 = vadd.f32 %v613, %v621
        %s626 = sld [smem:[#allocation9 + $0xa]]
        %v627 = vstv %s626
        %v628 = vmul.f32 %v520, %v627
        %v629 = vmul.f32 %v521, %v627
        %v632 = vrot.slane %v628, 2
        %v633 = vrot.slane %v629, 2
        %v636 = vadd.f32 %v624, %v632
        %v637 = vadd.f32 %v625, %v633
        %s638 = sld [smem:[#allocation9 + $0xb]]
        %v639 = vstv %s638
        %v640 = vmul.f32 %v520, %v639
        %v641 = vmul.f32 %v521, %v639
        %v644 = vrot.slane %v640, 3
        %v645 = vrot.slane %v641, 3
        %v648 = vadd.f32 %v636, %v644
        %v649 = vadd.f32 %v637, %v645
        %s650 = sld [smem:[#allocation10 + $0x2]]
        %v651 = vstv %s650
        %v652 = vadd.f32 %v648, %v651
        %v653 = vadd.f32 %v649, %v651
        %s654 = sld [smem:[#allocation9 + $0xc]]
        %v655 = vstv %s654
        %v656 = vmul.f32 %v520, %v655
        %v657 = vmul.f32 %v521, %v655
        %s658 = sld [smem:[#allocation9 + $0xd]]
        %v659 = vstv %s658
        %v660 = vmul.f32 %v520, %v659
        %v661 = vmul.f32 %v521, %v659
        %v664 = vrot.slane %v660, 1
        %v665 = vrot.slane %v661, 1
        %v668 = vadd.f32 %v656, %v664
        %v669 = vadd.f32 %v657, %v665
        %s670 = sld [smem:[#allocation9 + $0xe]]
        %v671 = vstv %s670
        %v672 = vmul.f32 %v520, %v671
        %v673 = vmul.f32 %v521, %v671
        %v676 = vrot.slane %v672, 2
        %v677 = vrot.slane %v673, 2
        %v680 = vadd.f32 %v668, %v676
        %v681 = vadd.f32 %v669, %v677
        %s682 = sld [smem:[#allocation9 + $0xf]]
        %v683 = vstv %s682
        %v684 = vmul.f32 %v520, %v683
        %v685 = vmul.f32 %v521, %v683
        %v688 = vrot.slane %v684, 3
        %v689 = vrot.slane %v685, 3
        %v692 = vadd.f32 %v680, %v688
        %v693 = vadd.f32 %v681, %v689
        %s694 = sld [smem:[#allocation10 + $0x3]]
        %v695 = vstv %s694
        %v696 = vadd.f32 %v692, %v695
        %v697 = vadd.f32 %v693, %v695
        %v700 = vrot.slane %v608, 7
        %v701 = vrot.slane %v609, 7
        %v706 = vrot.slane %v652, 6
        %v707 = vrot.slane %v653, 6
        %v712 = vrot.slane %v696, 5
        %v713 = vrot.slane %v697, 5
        %vm716 = vcmask 1040384
        %v717 = vsel %vm716, %v564, %v700
        %v718 = vsel %vm716, %v565, %v701
        %vm719 = vcmask 1041408
        %v720 = vsel %vm719, %v717, %v706
        %v721 = vsel %vm719, %v718, %v707
        %vm722 = vcmask 1042432
        %v723 = vsel %vm722, %v720, %v712
        %v724 = vsel %vm722, %v721, %v713
        %v727 = vcombine.low %v723, %v724
        %729 = vst [vmem:[%s294] sm:$0xff] %v727
        %s730 = sand.u32 %s143, 1
        %s731 = scalar_lea.sflag [#allocation4], %s730
        %s732 = sand.u32 %s143, 1
        %s733 = smul.addr %s732, 8
        %s734 = scalar_lea.vmem [#allocation12], %s733
        // Predicated region
        $region61: #{tpu_custom_call.1} parent=39 // pred_check
          %p735 = pneg %p153
        $region62: #{tpu_custom_call.1} parent=39 // pred_check_branch
          %737 = sbr.rel (%p735) target = $region64
        $region63: #{tpu_custom_call.1} parent=39 // pred_region
          %s739 = ssub.s32 128, 128
          %740 = vsyncadd %s731, %s739
          %s741 = smul.addr %s25, 2
          %s742 = smul.addr %s741, 64
          %s743 = scalar_lea.hbm %s5, %s742
          %s745 = sshll.u32 %s734, 4
          %s746 = int_to_ptr.vmem [resolvable:$true] %s745
          %748 = dma.vmem_to_hbm [thread:$0]  %s746, 128, %s743, %s731
        $region64: #{tpu_custom_call.1} parent=39 // pred_fallthru
          _
      $region40: #{tpu_custom_call.1} parent=5 // pred_fallthru
        _
      %p749 = scmp.le.s32.totalorder 2, %s20
      // Predicated region
      $region65: #{tpu_custom_call.1} parent=5 // pred_check
        %p750 = pneg %p749
      $region66: #{tpu_custom_call.1} parent=5 // pred_check_branch
        %752 = sbr.rel (%p750) target = $region68
      $region67: #{tpu_custom_call.1} parent=5 // pred_region
        %s753 = ssub.s32 %s20, 2
        // Predicated region
        $region69: #{tpu_custom_call.1} parent=67 // pred_check
          %p754 = pneg %p159
        $region70: #{tpu_custom_call.1} parent=67 // pred_check_branch
          %756 = sbr.rel (%p754) target = $region72
        $region71: #{tpu_custom_call.1} parent=67 // pred_region
          %s757 = sand.u32 %s144, 1
          %s758 = scalar_lea.sflag [#allocation4], %s757
          %s759 = sand.u32 %s144, 1
          %s760 = smul.addr %s759, 8
          %s761 = scalar_lea.vmem [#allocation12], %s760
          %762 = dma.done %s758, 128
        $region72: #{tpu_custom_call.1} parent=67 // pred_fallthru
          _
      $region68: #{tpu_custom_call.1} parent=5 // pred_fallthru
        _
    $region6: #{tpu_custom_call.1} parent=1 // loop_footer
      %s24 = sadd.s32 1, %s20
    $region7: #{tpu_custom_call.1} parent=1 // loop_footer_branch
      %19 = sbr.rel target = $region3
    $region8: #{tpu_custom_call.1} parent=1 // loop_exit
      _
    %763 = vsyncpa [#allocation3], 1
    %s764 = scalar_lea.sflag [#allocation3], 1
    %765 = vsyncpa %s764, 1
    %766 = vsyncpa [#allocation7], 1
    %767 = vsyncpa [#allocation4], 1
    %s768 = scalar_lea.sflag [#allocation4], 1
    %769 = vsyncpa %s768, 1
    %770 = vsyncpa [#allocation5], 1
    %s771 = scalar_lea.sflag [#allocation5], 1
    %772 = vsyncpa %s771, 1
    %773 = vsyncpa [#allocation11], 1

</llo_original>
